<compile_context>
chip_gen: v7x
topology: tpu7x:2x2x1
jax: 0.10.0
libtpu: 0.0.40
codegen_flags: <defaults>
</compile_context>

<pallas_src>
import jax
import jax.numpy as jnp
import numpy as np
from jax.experimental import pallas as pl
from jax.experimental.pallas import tpu as pltpu


def _mismatch_loss_kernel(net_ref, tgt_ref, out_ref,
                          t_sum_ref, o_sum_ref, to_sum_ref, t_max_ref):
    s = pl.program_id(1)

    # ---- init per-(image, class) accumulators at the first spatial tile ----
    @pl.when(s == 0)
    def _():
        t_sum_ref[...] = jnp.zeros_like(t_sum_ref)
        o_sum_ref[...] = jnp.zeros_like(o_sum_ref)
        to_sum_ref[...] = jnp.zeros_like(to_sum_ref)
        # Targets are (non-negative) masks; 0-init is a safe identity for max
        # because t_max is only ever compared against 1.0.
        t_max_ref[...] = jnp.zeros_like(t_max_ref)

    # ---- hot path: streamed spatial reductions over this S tile ----
    net = net_ref[...].astype(jnp.float32)     # [1, C, TS]
    tgt = tgt_ref[...].astype(jnp.float32)     # [1, C, TS]

    t_sum_ref[...] += jnp.sum(tgt, axis=2)             # target.sum()
    o_sum_ref[...] += jnp.sum(net, axis=2)             # net_out.sum()
    to_sum_ref[...] += jnp.sum(tgt * net, axis=2)      # (target * net_out).sum()
    t_max_ref[...] = jnp.maximum(t_max_ref[...], jnp.max(tgt, axis=2))

    # ---- finalize: GDice + class masking + per-image averaging ----
    @pl.when(s == pl.num_programs(1) - 1)
    def _():
        t_sum = t_sum_ref[...]                 # [1, C]
        o_sum = o_sum_ref[...]
        to_sum = to_sum_ref[...]
        t_max = t_max_ref[...]

        # GDice: weight_c = 1/t_sum^2 cancels between molecule and denominator:
        #   acc = 2 * (t*o).sum() / (t.sum() + o.sum())
        gdice = 1.0 - 2.0 * to_sum / (t_sum + o_sum)   # [1, C]

        # Reference control flow: a class contributes iff max(target[j,i]) == 1;
        # max_positiones only selects between two branches that both leave 0.
        losses = jnp.where(t_max == 1.0, gdice, 0.0)   # [1, C]

        loss_sum = jnp.sum(losses, axis=1, keepdims=True)                   # [1, 1]
        n_nonzero = jnp.sum((losses != 0.0).astype(jnp.float32), axis=1,
                            keepdims=True)                                  # [1, 1]
        # Per-image mean over contributing classes.  If an image has no
        # contributing class this is 0/0 = NaN, exactly like the reference.
        out_ref[...] = (loss_sum / n_nonzero)[None]    # [1, 1, 1]


def _pick_tile(S, tile_s=None):
    """Largest lane-aligned spatial tile that divides S (or the full extent)."""
    if tile_s is not None:
        assert S % tile_s == 0, "tile_s must divide H*W"
        return tile_s
    if S % 128 != 0:
        return S  # full-extent last dim is always a legal block shape
    for ts in (2048, 1024, 512, 256, 128):
        if S % ts == 0:
            return ts
    return S


def mismatch_loss(net_out, target, max_positiones=None, tile_s=None):
    """Pallas implementation of Mismatch_loss.forward. Returns an f32 scalar.

    `max_positiones` is accepted for API compatibility but is not read: in the
    reference it only chooses between two branches that both leave the class
    loss at 0, so it never affects the result.
    """
    del max_positiones
    B, C, H, W = net_out.shape
    S = H * W
    n = net_out.reshape(B, C, S)   # native dtype; cast happens in-kernel
    t = target.reshape(B, C, S)

    ts = _pick_tile(S, tile_s)
    n_s = S // ts

    in_spec = pl.BlockSpec((1, C, ts), lambda b, s: (b, 0, s))
    img_losses = pl.pallas_call(
        _mismatch_loss_kernel,
        out_shape=jax.ShapeDtypeStruct((B, 1, 1), jnp.float32),
        grid=(B, n_s),
        in_specs=[in_spec, in_spec],
        # Same block index across the S axis -> per-image result stays
        # VMEM-resident until the finalize step.
        out_specs=pl.BlockSpec((1, 1, 1), lambda b, s: (b, 0, 0)),
        scratch_shapes=[
            pltpu.VMEM((1, C), jnp.float32),   # t_sum
            pltpu.VMEM((1, C), jnp.float32),   # o_sum
            pltpu.VMEM((1, C), jnp.float32),   # to_sum
            pltpu.VMEM((1, C), jnp.float32),   # t_max
        ],
        compiler_params=pltpu.CompilerParams(
            dimension_semantics=("parallel", "arbitrary")),
    )(n, t)

    # Trivial batch mean over B scalars (kept in JAX so the B grid axis can be
    # sharded across TensorCores without a cross-core output race).
    return jnp.sum(img_losses[:, 0, 0]) / B


def _reference(net_out, target, max_pos):
    """NumPy port of the PyTorch module, for a correctness check."""
    net_out = np.asarray(net_out, np.float32)
    target = np.asarray(target, np.float32)
    max_pos = np.asarray(max_pos, np.float32)
    B, C = target.shape[:2]
    img_losses = np.zeros(B, np.float32)
    for j in range(B):
        losses = np.zeros(C, np.float32)
        for i in range(C):
            mt = target[j, i].max()
            mp = max_pos[j, i].max()
            if mt == 0 and mp == 0:
                continue
            elif mt == 1:
                ts = target[j, i].sum()
                w = 1.0 / ts ** 2
                mol = w * (target[j, i] * net_out[j, i]).sum()
                den = w * (ts + net_out[j, i].sum())
                losses[i] = 1.0 - 2.0 * mol / den
        img_losses[j] = losses.sum() / np.count_nonzero(losses)
    return img_losses.sum() / B


if __name__ == "__main__":
    key = jax.random.PRNGKey(0)
    k1, k2, k3 = jax.random.split(key, 3)

    B, C, H, W = 2, 4, 16, 16
    # net_out: soft predictions in [0, 1]; target / max_positiones: binary masks.
    net_out = jax.random.uniform(k1, (B, C, H, W), dtype=jnp.float32)
    target = (jax.random.uniform(k2, (B, C, H, W)) > 0.5).astype(jnp.float32)
    max_positiones = (jax.random.uniform(k3, (B, C, H, W)) > 0.5).astype(jnp.float32)

    ref = _reference(net_out, target, max_positiones)

    # Default (largest) spatial tile.
    result = jax.block_until_ready(mismatch_loss(net_out, target, max_positiones))
    assert np.isfinite(float(result)), "kernel produced non-finite loss"
    np.testing.assert_allclose(float(result), float(ref), rtol=1e-5, atol=1e-5)

    # Force multiple S tiles to exercise the pipelined accumulator path.
    result_tiled = jax.block_until_ready(
        mismatch_loss(net_out, target, max_positiones, tile_s=128))
    np.testing.assert_allclose(float(result_tiled), float(ref), rtol=1e-5, atol=1e-5)

    print("KERNEL_OK")
</pallas_src>

<mosaic_0001>
module attributes {stable_mosaic.version = 11 : i64} {
  func.func @_mismatch_loss_kernel(%arg0: i32, %arg1: i32, %arg2: memref<1x4x256xf32, #tpu.memory_space<vmem>>, %arg3: memref<1x4x256xf32, #tpu.memory_space<vmem>>, %arg4: memref<1x1x1xf32, #tpu.memory_space<vmem>>, %arg5: memref<1x4xf32, #tpu.memory_space<vmem>>, %arg6: memref<1x4xf32, #tpu.memory_space<vmem>>, %arg7: memref<1x4xf32, #tpu.memory_space<vmem>>, %arg8: memref<1x4xf32, #tpu.memory_space<vmem>>) attributes {dimension_semantics = [#tpu.dimension_semantics<parallel>, #tpu.dimension_semantics<arbitrary>], iteration_bounds = array<i64: 2, 1>, scalar_prefetch = 0 : i64, scratch_operands = 4 : i64, tpu.core_type = #tpu.core_type<tc>, window_params = [{transform_indices = @transform_0, window_bounds = array<i64: 1, 4, 256>}, {transform_indices = @transform_1, window_bounds = array<i64: 1, 4, 256>}, {transform_indices = @transform_2, window_bounds = array<i64: 1, 1, 1>}]} {
    %c0_i32 = arith.constant 0 : i32
    %0 = arith.cmpi eq, %arg1, %c0_i32 : i32
    %1 = arith.extui %0 : i1 to i32
    %c0_i32_0 = arith.constant 0 : i32
    %2 = arith.cmpi ne, %1, %c0_i32_0 : i32
    scf.if %2 {
      %cst_27 = arith.constant 0.000000e+00 : f32
      %25 = vector.broadcast %cst_27 : f32 to vector<1x4xf32>
      %c0_28 = arith.constant 0 : index
      %c0_29 = arith.constant 0 : index
      %26 = vector.load %arg5[%c0_28, %c0_29] : memref<1x4xf32, #tpu.memory_space<vmem>>, vector<1x4xf32>
      tpu.vector_store %arg5[%c0_28, %c0_29], %25 {strides = array<i32>} : memref<1x4xf32, #tpu.memory_space<vmem>>, vector<1x4xf32>,
      %cst_30 = arith.constant 0.000000e+00 : f32
      %27 = vector.broadcast %cst_30 : f32 to vector<1x4xf32>
      %c0_31 = arith.constant 0 : index
      %c0_32 = arith.constant 0 : index
      %28 = vector.load %arg6[%c0_31, %c0_32] : memref<1x4xf32, #tpu.memory_space<vmem>>, vector<1x4xf32>
      tpu.vector_store %arg6[%c0_31, %c0_32], %27 {strides = array<i32>} : memref<1x4xf32, #tpu.memory_space<vmem>>, vector<1x4xf32>,
      %cst_33 = arith.constant 0.000000e+00 : f32
      %29 = vector.broadcast %cst_33 : f32 to vector<1x4xf32>
      %c0_34 = arith.constant 0 : index
      %c0_35 = arith.constant 0 : index
      %30 = vector.load %arg7[%c0_34, %c0_35] : memref<1x4xf32, #tpu.memory_space<vmem>>, vector<1x4xf32>
      tpu.vector_store %arg7[%c0_34, %c0_35], %29 {strides = array<i32>} : memref<1x4xf32, #tpu.memory_space<vmem>>, vector<1x4xf32>,
      %cst_36 = arith.constant 0.000000e+00 : f32
      %31 = vector.broadcast %cst_36 : f32 to vector<1x4xf32>
      %c0_37 = arith.constant 0 : index
      %c0_38 = arith.constant 0 : index
      %32 = vector.load %arg8[%c0_37, %c0_38] : memref<1x4xf32, #tpu.memory_space<vmem>>, vector<1x4xf32>
      tpu.vector_store %arg8[%c0_37, %c0_38], %31 {strides = array<i32>} : memref<1x4xf32, #tpu.memory_space<vmem>>, vector<1x4xf32>,
    } else {
    }
    %c0 = arith.constant 0 : index
    %c0_1 = arith.constant 0 : index
    %c0_2 = arith.constant 0 : index
    %3 = vector.load %arg2[%c0, %c0_1, %c0_2] : memref<1x4x256xf32, #tpu.memory_space<vmem>>, vector<1x4x256xf32>
    %c0_3 = arith.constant 0 : index
    %c0_4 = arith.constant 0 : index
    %c0_5 = arith.constant 0 : index
    %4 = vector.load %arg3[%c0_3, %c0_4, %c0_5] : memref<1x4x256xf32, #tpu.memory_space<vmem>>, vector<1x4x256xf32>
    %c0_6 = arith.constant 0 : index
    %c0_7 = arith.constant 0 : index
    %5 = vector.load %arg5[%c0_6, %c0_7] : memref<1x4xf32, #tpu.memory_space<vmem>>, vector<1x4xf32>
    %cst = arith.constant dense<0.000000e+00> : vector<1x4xf32>
    %6 = vector.multi_reduction <add>, %4, %cst [2] : vector<1x4x256xf32> to vector<1x4xf32>
    %7 = arith.addf %5, %6 : vector<1x4xf32>
    %c0_8 = arith.constant 0 : index
    %c0_9 = arith.constant 0 : index
    %8 = vector.load %arg5[%c0_8, %c0_9] : memref<1x4xf32, #tpu.memory_space<vmem>>, vector<1x4xf32>
    tpu.vector_store %arg5[%c0_8, %c0_9], %7 {strides = array<i32>} : memref<1x4xf32, #tpu.memory_space<vmem>>, vector<1x4xf32>,
    %c0_10 = arith.constant 0 : index
    %c0_11 = arith.constant 0 : index
    %9 = vector.load %arg6[%c0_10, %c0_11] : memref<1x4xf32, #tpu.memory_space<vmem>>, vector<1x4xf32>
    %cst_12 = arith.constant dense<0.000000e+00> : vector<1x4xf32>
    %10 = vector.multi_reduction <add>, %3, %cst_12 [2] : vector<1x4x256xf32> to vector<1x4xf32>
    %11 = arith.addf %9, %10 : vector<1x4xf32>
    %c0_13 = arith.constant 0 : index
    %c0_14 = arith.constant 0 : index
    %12 = vector.load %arg6[%c0_13, %c0_14] : memref<1x4xf32, #tpu.memory_space<vmem>>, vector<1x4xf32>
    tpu.vector_store %arg6[%c0_13, %c0_14], %11 {strides = array<i32>} : memref<1x4xf32, #tpu.memory_space<vmem>>, vector<1x4xf32>,
    %c0_15 = arith.constant 0 : index
    %c0_16 = arith.constant 0 : index
    %13 = vector.load %arg7[%c0_15, %c0_16] : memref<1x4xf32, #tpu.memory_space<vmem>>, vector<1x4xf32>
    %14 = arith.mulf %4, %3 : vector<1x4x256xf32>
    %cst_17 = arith.constant dense<0.000000e+00> : vector<1x4xf32>
    %15 = vector.multi_reduction <add>, %14, %cst_17 [2] : vector<1x4x256xf32> to vector<1x4xf32>
    %16 = arith.addf %13, %15 : vector<1x4xf32>
    %c0_18 = arith.constant 0 : index
    %c0_19 = arith.constant 0 : index
    %17 = vector.load %arg7[%c0_18, %c0_19] : memref<1x4xf32, #tpu.memory_space<vmem>>, vector<1x4xf32>
    tpu.vector_store %arg7[%c0_18, %c0_19], %16 {strides = array<i32>} : memref<1x4xf32, #tpu.memory_space<vmem>>, vector<1x4xf32>,
    %c0_20 = arith.constant 0 : index
    %c0_21 = arith.constant 0 : index
    %18 = vector.load %arg8[%c0_20, %c0_21] : memref<1x4xf32, #tpu.memory_space<vmem>>, vector<1x4xf32>
    %cst_22 = arith.constant dense<0xFF800000> : vector<1x4xf32>
    %19 = vector.multi_reduction <maximumf>, %4, %cst_22 [2] : vector<1x4x256xf32> to vector<1x4xf32>
    %20 = arith.maximumf %18, %19 : vector<1x4xf32>
    %c0_23 = arith.constant 0 : index
    %c0_24 = arith.constant 0 : index
    %21 = vector.load %arg8[%c0_23, %c0_24] : memref<1x4xf32, #tpu.memory_space<vmem>>, vector<1x4xf32>
    tpu.vector_store %arg8[%c0_23, %c0_24], %20 {strides = array<i32>} : memref<1x4xf32, #tpu.memory_space<vmem>>, vector<1x4xf32>,
    %c0_i32_25 = arith.constant 0 : i32
    %22 = arith.cmpi eq, %arg1, %c0_i32_25 : i32
    %23 = arith.extui %22 : i1 to i32
    %c0_i32_26 = arith.constant 0 : i32
    %24 = arith.cmpi ne, %23, %c0_i32_26 : i32
    scf.if %24 {
      %c0_27 = arith.constant 0 : index
      %c0_28 = arith.constant 0 : index
      %25 = vector.load %arg5[%c0_27, %c0_28] : memref<1x4xf32, #tpu.memory_space<vmem>>, vector<1x4xf32>
      %c0_29 = arith.constant 0 : index
      %c0_30 = arith.constant 0 : index
      %26 = vector.load %arg6[%c0_29, %c0_30] : memref<1x4xf32, #tpu.memory_space<vmem>>, vector<1x4xf32>
      %c0_31 = arith.constant 0 : index
      %c0_32 = arith.constant 0 : index
      %27 = vector.load %arg7[%c0_31, %c0_32] : memref<1x4xf32, #tpu.memory_space<vmem>>, vector<1x4xf32>
      %c0_33 = arith.constant 0 : index
      %c0_34 = arith.constant 0 : index
      %28 = vector.load %arg8[%c0_33, %c0_34] : memref<1x4xf32, #tpu.memory_space<vmem>>, vector<1x4xf32>
      %cst_35 = arith.constant 2.000000e+00 : f32
      %29 = vector.broadcast %cst_35 : f32 to vector<1x4xf32>
      %30 = arith.mulf %29, %27 : vector<1x4xf32>
      %31 = arith.addf %25, %26 : vector<1x4xf32>
      %32 = arith.divf %30, %31 : vector<1x4xf32>
      %cst_36 = arith.constant 1.000000e+00 : f32
      %33 = vector.broadcast %cst_36 : f32 to vector<1x4xf32>
      %34 = arith.subf %33, %32 : vector<1x4xf32>
      %cst_37 = arith.constant 1.000000e+00 : f32
      %35 = vector.broadcast %cst_37 : f32 to vector<1x4xf32>
      %36 = arith.cmpf oeq, %28, %35 : vector<1x4xf32>
      %cst_38 = arith.constant 0.000000e+00 : f32
      %37 = vector.broadcast %cst_38 : f32 to vector<1x4xf32>
      %38 = arith.select %36, %34, %37 : vector<1x4xi1>, vector<1x4xf32>
      %cst_39 = arith.constant dense<0.000000e+00> : vector<1xf32>
      %39 = vector.multi_reduction <add>, %38, %cst_39 [1] : vector<1x4xf32> to vector<1xf32>
      %40 = vector.shape_cast %39 : vector<1xf32> to vector<1x1xf32>
      %cst_40 = arith.constant 0.000000e+00 : f32
      %41 = vector.broadcast %cst_40 : f32 to vector<1x4xf32>
      %42 = arith.cmpf one, %38, %41 : vector<1x4xf32>
      %43 = arith.extui %42 : vector<1x4xi1> to vector<1x4xi32>
      %44 = arith.sitofp %43 : vector<1x4xi32> to vector<1x4xf32>
      %cst_41 = arith.constant dense<0.000000e+00> : vector<1xf32>
      %45 = vector.multi_reduction <add>, %44, %cst_41 [1] : vector<1x4xf32> to vector<1xf32>
      %46 = vector.shape_cast %45 : vector<1xf32> to vector<1x1xf32>
      %47 = arith.divf %40, %46 : vector<1x1xf32>
      %48 = vector.shape_cast %47 : vector<1x1xf32> to vector<1x1x1xf32>
      %c0_42 = arith.constant 0 : index
      %c0_43 = arith.constant 0 : index
      %c0_44 = arith.constant 0 : index
      %49 = vector.load %arg4[%c0_42, %c0_43, %c0_44] : memref<1x1x1xf32, #tpu.memory_space<vmem>>, vector<1x1x1xf32>
      tpu.vector_store %arg4[%c0_42, %c0_43, %c0_44], %48 {strides = array<i32>} : memref<1x1x1xf32, #tpu.memory_space<vmem>>, vector<1x1x1xf32>,
    } else {
    }
    return
  }
  func.func @transform_0(%arg0: i32, %arg1: i32) -> (i32, i32, i32) {
    %c0_i32 = arith.constant 0 : i32
    %c0_i32_0 = arith.constant 0 : i32
    return %arg0, %c0_i32, %arg1 : i32, i32, i32
  }
  func.func @transform_1(%arg0: i32, %arg1: i32) -> (i32, i32, i32) {
    %c0_i32 = arith.constant 0 : i32
    %c0_i32_0 = arith.constant 0 : i32
    return %arg0, %c0_i32, %arg1 : i32, i32, i32
  }
  func.func @transform_2(%arg0: i32, %arg1: i32) -> (i32, i32, i32) {
    %c0_i32 = arith.constant 0 : i32
    %c0_i32_0 = arith.constant 0 : i32
    %c0_i32_1 = arith.constant 0 : i32
    return %arg0, %c0_i32, %c0_i32_0 : i32, i32, i32
  }
}

</mosaic_0001>

<llo_original>
// kernel: tpu_custom_call.1
$region0: #{tpu_custom_call.1}
  #allocation0 [shape = 'u32[]', space=smem, size = 0x4, offset = 0x4, fixed_abs, tag = 'smem constant byte address 0x4 - core index']
  #allocation1 [shape = 'u32[144,128]{1,0:T(1,128)}', space=vmem, size = 0x12000, scoped, tag = 'internal scratch']
  #allocation2 [shape = 'f32[1,4]{1,0:T(1,128)}', space=vmem, size = 0x200, scoped, tag = 'scratch operand']
  #allocation3 [shape = 'f32[1,4]{1,0:T(1,128)}', space=vmem, size = 0x200, scoped, tag = 'scratch operand']
  #allocation4 [shape = 'f32[1,4]{1,0:T(1,128)}', space=vmem, size = 0x200, scoped, tag = 'scratch operand']
  #allocation5 [shape = 'f32[1,4]{1,0:T(1,128)}', space=vmem, size = 0x200, scoped, tag = 'scratch operand']
  %s0 = inlined_call_operand.hbm [shape: f32[2,4,256], index: 0, kind: input, shape index: {}]
  %s1 = inlined_call_operand.hbm [shape: f32[2,4,256], index: 1, kind: input, shape index: {}]
  %s2 = inlined_call_operand.vmem [shape: f32[2,1,1], index: 2, kind: output, shape index: {}]
  %s3 = sld [smem:[#allocation0]]
  $region57: #{tpu_custom_call.1} parent=0
    _
  %s5 = ssub.s32 1, %s3
  %s6 = scalar_select 0, %s5, %s3
  $region1: #{tpu_custom_call.1} parent=0
    #allocation6 [shape = 'u8[8192]{0}', space=vmem, size = 0x2000, scoped, tag = 'input window, operand 0']
    #allocation7 [shape = 's32[2]{0}', space=sflag, size = 0x8, scoped, tag = 'scoped memory for tpu_custom_call.1']
    #allocation8 [shape = 'u8[8192]{0}', space=vmem, size = 0x2000, scoped, tag = 'input window, operand 1']
    #allocation9 [shape = 's32[2]{0}', space=sflag, size = 0x8, scoped, tag = 'scoped memory for tpu_custom_call.1']
    %7 = vsyncpa [#allocation7], 0
    %s8 = scalar_lea.sflag [#allocation7], 1
    %9 = vsyncpa %s8, 0
    %10 = vsyncpa [#allocation9], 0
    %s11 = scalar_lea.sflag [#allocation9], 1
    %12 = vsyncpa %s11, 0
    loop: start=0, step=1, limit=4
    $region2: #{tpu_custom_call.1} parent=1 // loop_pre_header
      _
    $region3: #{tpu_custom_call.1} parent=1 // loop_header
      %s14 = sphi 0, %s18
      %p15 = scmp.ge.s32.totalorder %s14, 4
      %s21 = sphi 0, %s33
      %s22 = sphi 0, %s29
      %s23 = sphi 0, %s21
      %s24 = sphi 0, %s22
      %s25 = sphi 0, %s23
      %s26 = sphi 0, %s24
      %s38 = sphi 0, %s40
      %s41 = sphi 0, %s38
      %s42 = sphi 0, %s41
      %s58 = sphi 0, %s42
      %s66 = sphi 0, %s68
      %s69 = sphi 0, %s66
      %s70 = sphi 0, %s69
      %s86 = sphi 0, %s70
      %s92 = sphi 0, %s94
      %s95 = sphi 0, %s92
      %s96 = sphi 0, %s95
      %s112 = sphi 0, %s96
    $region4: #{tpu_custom_call.1} parent=1 // loop_header_branch
      %17 = sbr.rel (%p15) target = $region8
    $region5: #{tpu_custom_call.1} parent=1 // loop_body
      %s19 = ssub.s32 %s14, 1
      %s20 = ssub.s32 %s14, 2
      %s27 = sadd.s32 1, %s22
      %p28 = scmp.ge.s32.totalorder %s27, 1
      %s29 = scalar_select %p28, 0, %s27
      %s30 = sadd.s32 1, %s21
      %s31 = scalar_select %p28, %s30, %s21
      %p32 = scmp.ge.s32.totalorder %s31, 2
      %s33 = scalar_select %p32, 0, %s31
      %s34 = ssub.s32 %s21, %s33
      %s35 = ssub.s32 %s22, %s29
      %s36 = sor.u32 %s34, %s35
      %p37 = scmp.eq.s32.totalorder %s36, 0
      %s39 = sadd.s32 %s38, 1
      %s40 = scalar_select %p37, %s38, %s39
      %p43 = pneg %p37
      %p44 = scmp.eq.s32.totalorder %s14, 1
      %p45 = por %p43, %p44
      %p46 = scmp.ne.s32.totalorder %s38, %s41
      %p47 = scmp.eq.s32.totalorder %s14, 0
      %p48 = por %p46, %p47
      %p49 = scmp.ne.s32.totalorder %s38, %s41
      %p50 = scmp.eq.s32.totalorder %s19, 1
      %p51 = por %p49, %p50
      %p52 = scmp.ne.s32.totalorder %s41, %s42
      %p53 = scmp.eq.s32.totalorder %s19, 0
      %p54 = por %p52, %p53
      %p55 = scmp.ne.s32.totalorder %s41, %s42
      %p56 = scmp.eq.s32.totalorder %s20, 1
      %p57 = por %p55, %p56
      %p59 = scmp.ne.s32.totalorder %s42, %s58
      %p60 = scmp.eq.s32.totalorder %s20, 0
      %p61 = por %p59, %p60
      %s62 = ssub.s32 %s21, %s33
      %s63 = ssub.s32 %s22, %s29
      %s64 = sor.u32 %s62, %s63
      %p65 = scmp.eq.s32.totalorder %s64, 0
      %s67 = sadd.s32 %s66, 1
      %s68 = scalar_select %p65, %s66, %s67
      %p71 = pneg %p65
      %p72 = scmp.eq.s32.totalorder %s14, 1
      %p73 = por %p71, %p72
      %p74 = scmp.ne.s32.totalorder %s66, %s69
      %p75 = scmp.eq.s32.totalorder %s14, 0
      %p76 = por %p74, %p75
      %p77 = scmp.ne.s32.totalorder %s66, %s69
      %p78 = scmp.eq.s32.totalorder %s19, 1
      %p79 = por %p77, %p78
      %p80 = scmp.ne.s32.totalorder %s69, %s70
      %p81 = scmp.eq.s32.totalorder %s19, 0
      %p82 = por %p80, %p81
      %p83 = scmp.ne.s32.totalorder %s69, %s70
      %p84 = scmp.eq.s32.totalorder %s20, 1
      %p85 = por %p83, %p84
      %p87 = scmp.ne.s32.totalorder %s70, %s86
      %p88 = scmp.eq.s32.totalorder %s20, 0
      %p89 = por %p87, %p88
      %s90 = ssub.s32 %s21, %s33
      %p91 = scmp.eq.s32.totalorder %s90, 0
      %s93 = sadd.s32 %s92, 1
      %s94 = scalar_select %p91, %s92, %s93
      %p97 = pneg %p91
      %p98 = scmp.eq.s32.totalorder %s14, 1
      %p99 = por %p97, %p98
      %p100 = scmp.ne.s32.totalorder %s92, %s95
      %p101 = scmp.eq.s32.totalorder %s14, 0
      %p102 = por %p100, %p101
      %p103 = scmp.ne.s32.totalorder %s92, %s95
      %p104 = scmp.eq.s32.totalorder %s19, 1
      %p105 = por %p103, %p104
      %p106 = scmp.ne.s32.totalorder %s95, %s96
      %p107 = scmp.eq.s32.totalorder %s19, 0
      %p108 = por %p106, %p107
      %p109 = scmp.ne.s32.totalorder %s95, %s96
      %p110 = scmp.eq.s32.totalorder %s20, 1
      %p111 = por %p109, %p110
      %p113 = scmp.ne.s32.totalorder %s96, %s112
      %p114 = scmp.eq.s32.totalorder %s20, 0
      %p115 = por %p113, %p114
      %p116 = scmp.le.s32.totalorder 1, %s14
      %p117 = scmp.lt.s32.totalorder %s14, 3
      %p118 = pnand %p116, %p117
      %p119 = pneg %p118
      // Predicated region
      $region9: #{tpu_custom_call.1} parent=5 // pred_check
        _
      $region10: #{tpu_custom_call.1} parent=5 // pred_check_branch
        %121 = sbr.rel (%p118) target = $region12
      $region11: #{tpu_custom_call.1} parent=5 // pred_region
        %s122 = ssub.s32 %s14, 1
      $region12: #{tpu_custom_call.1} parent=5 // pred_fallthru
        _
      %p123 = scmp.lt.s32.totalorder %s14, 2
      // Predicated region
      $region13: #{tpu_custom_call.1} parent=5 // pred_check
        %p124 = pneg %p123
      $region14: #{tpu_custom_call.1} parent=5 // pred_check_branch
        %126 = sbr.rel (%p124) target = $region16
      $region15: #{tpu_custom_call.1} parent=5 // pred_region
        // Predicated region
        $region17: #{tpu_custom_call.1} parent=15 // pred_check
          %p127 = pneg %p48
        $region18: #{tpu_custom_call.1} parent=15 // pred_check_branch
          %129 = sbr.rel (%p127) target = $region20
        $region19: #{tpu_custom_call.1} parent=15 // pred_region
          %s130 = sand.u32 %s38, 1
          %s131 = scalar_lea.sflag [#allocation7], %s130
          %s132 = sand.u32 %s38, 1
          %s133 = smul.addr %s132, 8
          %s134 = scalar_lea.vmem [#allocation6], %s133
          %s135 = smul.u32 2, %s22
          %s137 = ssub.s32 128, 128
          %138 = vsyncadd %s131, %s137
          %s139 = smul.addr %s21, 2
          %s140 = sadd.s32 %s135, %s139
          %s141 = smul.addr %s140, 64
          %s142 = scalar_lea.hbm %s0, %s141
          %s144 = sshll.u32 %s134, 4
          %s145 = int_to_ptr.vmem [resolvable:$true] %s144
          %147 = dma.hbm_to_vmem [thread:$0]  %s142, 128, %s145, %s131
        $region20: #{tpu_custom_call.1} parent=15 // pred_fallthru
          _
        // Predicated region
        $region21: #{tpu_custom_call.1} parent=15 // pred_check
          %p148 = pneg %p76
        $region22: #{tpu_custom_call.1} parent=15 // pred_check_branch
          %150 = sbr.rel (%p148) target = $region24
        $region23: #{tpu_custom_call.1} parent=15 // pred_region
          %s151 = sand.u32 %s66, 1
          %s152 = scalar_lea.sflag [#allocation9], %s151
          %s153 = sand.u32 %s66, 1
          %s154 = smul.addr %s153, 8
          %s155 = scalar_lea.vmem [#allocation8], %s154
          %s156 = smul.u32 2, %s22
          %s158 = ssub.s32 128, 128
          %159 = vsyncadd %s152, %s158
          %s160 = smul.addr %s21, 2
          %s161 = sadd.s32 %s156, %s160
          %s162 = smul.addr %s161, 64
          %s163 = scalar_lea.hbm %s1, %s162
          %s165 = sshll.u32 %s155, 4
          %s166 = int_to_ptr.vmem [resolvable:$true] %s165
          %168 = dma.hbm_to_vmem [thread:$0]  %s163, 128, %s166, %s152
        $region24: #{tpu_custom_call.1} parent=15 // pred_fallthru
          _
      $region16: #{tpu_custom_call.1} parent=5 // pred_fallthru
        _
      %p169 = scmp.le.s32.totalorder 1, %s14
      %p170 = scmp.lt.s32.totalorder %s14, 3
      %p171 = pnand %p169, %p170
      %p172 = pneg %p171
      // Predicated region
      $region25: #{tpu_custom_call.1} parent=5 // pred_check
        _
      $region26: #{tpu_custom_call.1} parent=5 // pred_check_branch
        %174 = sbr.rel (%p171) target = $region28
      $region27: #{tpu_custom_call.1} parent=5 // pred_region
        %s175 = ssub.s32 %s14, 1
        %s176 = sand.u32 %s41, 1
        %s177 = scalar_lea.sflag [#allocation7], %s176
        %s178 = sand.u32 %s41, 1
        %s179 = smul.addr %s178, 8
        %s180 = scalar_lea.vmem [#allocation6], %s179
        // Predicated region
        $region29: #{tpu_custom_call.1} parent=27 // pred_check
          %p181 = pneg %p54
        $region30: #{tpu_custom_call.1} parent=27 // pred_check_branch
          %183 = sbr.rel (%p181) target = $region32
        $region31: #{tpu_custom_call.1} parent=27 // pred_region
          %184 = dma.done %s177, 128
        $region32: #{tpu_custom_call.1} parent=27 // pred_fallthru
          _
        %s185 = sand.u32 %s69, 1
        %s186 = scalar_lea.sflag [#allocation9], %s185
        %s187 = sand.u32 %s69, 1
        %s188 = smul.addr %s187, 8
        %s189 = scalar_lea.vmem [#allocation8], %s188
        // Predicated region
        $region33: #{tpu_custom_call.1} parent=27 // pred_check
          %p190 = pneg %p82
        $region34: #{tpu_custom_call.1} parent=27 // pred_check_branch
          %192 = sbr.rel (%p190) target = $region36
        $region35: #{tpu_custom_call.1} parent=27 // pred_region
          %193 = dma.done %s186, 128
        $region36: #{tpu_custom_call.1} parent=27 // pred_fallthru
          _
        %s194 = sand.u32 %s41, 1
        %s195 = scalar_lea.sflag [#allocation7], %s194
        %s196 = sand.u32 %s41, 1
        %s197 = smul.addr %s196, 8
        %s198 = scalar_lea.vmem [#allocation6], %s197
        %p199 = pneg %p54
        %p200 = pneg %p51
        %s201 = sand.u32 %s69, 1
        %s202 = scalar_lea.sflag [#allocation9], %s201
        %s203 = sand.u32 %s69, 1
        %s204 = smul.addr %s203, 8
        %s205 = scalar_lea.vmem [#allocation8], %s204
        %p206 = pneg %p82
        %p207 = pneg %p79
        %p208 = pneg %p108
        %p209 = pneg %p105
        %p210 = scmp.lt.s32.totalorder %s23, 1
        %s211 = scalar_select %p210, %s23, 1
        %s212 = scalar_lea.vmem %s2, %s211
        %s213 = smul.u32 2, %s24
        %s214 = smul.u32 2, %s24
        %p215 = scmp.lt.s32.totalorder %s23, 1
        %s216 = scalar_select %p215, %s23, 1
        %s217 = scalar_lea.vmem %s2, %s216
        %p218 = scmp.eq.s32.totalorder %s24, 0
        // Predicated region
        $region37: #{tpu_custom_call.1} parent=27 // pred_check
          %p219 = pneg %p218
        $region38: #{tpu_custom_call.1} parent=27 // pred_check_branch
          %221 = sbr.rel (%p219) target = $region40
        $region39: #{tpu_custom_call.1} parent=27 // pred_region
          %vm222 = vcmask 24576
          %223 = vst.msk [vmem:[#allocation2] sm:$0x1] %vm222, 0.0
          %224 = vst.msk [vmem:[#allocation3] sm:$0x1] %vm222, 0.0
          %225 = vst.msk [vmem:[#allocation4] sm:$0x1] %vm222, 0.0
          %226 = vst.msk [vmem:[#allocation5] sm:$0x1] %vm222, 0.0
        $region40: #{tpu_custom_call.1} parent=27 // pred_fallthru
          _
        %v227 = vld [vmem:[%s180] sm:$0xff]
        %v228 = vld [vmem:[%s189] sm:$0xff]
        %v229 = vld [vmem:[#allocation2] sm:$0x1]
        %v231 = vcombine.high %v228, %v228
        %vm233 = vcmask 1043456
        %v234 = vsel %vm233, %v228, 0.0
        %v235 = vsel %vm233, %v231, 0.0
        %v236 = vadd.f32 %v234, %v235
        %237 = vadd.xlane.f32.xlu0 %v236
        %v238 = vpop.xlane.xlu0 %237
        %v240 = vlaneseq
        %v241 = vshrl.u32 %v240, 7
        %v242 = vsub.s32 0, %v241
        %v243 = vrot.slane %v238, %v242
        %v244 = vlaneseq
        %v245 = vshrl.u32 %v244, 7
        %v246 = vsub.s32 1, %v245
        %v247 = vrot.slane %v238, %v246
        %v248 = vlaneseq
        %v249 = vshrl.u32 %v248, 7
        %v250 = vsub.s32 2, %v249
        %v251 = vrot.slane %v238, %v250
        %v252 = vlaneseq
        %v253 = vshrl.u32 %v252, 7
        %v254 = vsub.s32 3, %v253
        %v255 = vrot.slane %v238, %v254
        %v256 = vcombine.low %v243, %v247
        %v257 = vcombine.low %v251, %v255
        %v259 = vunpack.c.l.s4 1966171168
        %v260 = vunpack.c.0.s8 %v259
        %v261 = vlaneseq
        %v262 = vshrl.u32 %v261, 7
        %v263 = vsub.s32 %v260, %v262
        %v264 = vrot.slane %v256, %v263
        %v266 = vunpack.c.l.s4 1966171168
        %v267 = vunpack.c.0.s8 %v266
        %v268 = vlaneseq
        %v269 = vshrl.u32 %v268, 7
        %v270 = vsub.s32 %v267, %v269
        %v271 = vrot.slane %v257, %v270
        %v272 = vcombine.low %v264, %v271
        %v274 = vunpack.c.l.s4 1966171168
        %v275 = vunpack.c.0.s8 %v274
        %v276 = vlaneseq
        %v277 = vshrl.u32 %v276, 7
        %v278 = vsub.s32 %v275, %v277
        %v279 = vrot.slane %v272, %v278
        %280 = vset.pattern.permute.xlu0 0
        %281 = vperm.xlu0 %280, %v279
        %v282 = vpop.permute.xlu0 %281
        %v283 = vlaneseq
        %v284 = vand.u32 %v283, 127
        %v285 = vlaneseq
        %v286 = vshrl.u32 %v285, 7
        %v287 = vsub.s32 %v284, %v286
        %v288 = vrot.slane %v282, %v287
        %v290 = vunpack.c.l.s4 1966171168
        %v291 = vunpack.c.0.s8 %v290
        %v292 = vlaneseq
        %v293 = vshrl.u32 %v292, 7
        %v294 = vsub.s32 %v291, %v293
        %v295 = vrot.slane %v288, %v294
        %v297 = vunpack.c.l.s4 1966171168
        %v298 = vunpack.c.0.s8 %v297
        %v299 = vlaneseq
        %v300 = vshrl.u32 %v299, 7
        %v301 = vsub.s32 %v298, %v300
        %v302 = vrot.slane %v295, %v301
        %v304 = vadd.f32 %v229, %v302
        %vm305 = vcmask 24576
        %306 = vst.msk [vmem:[#allocation2] sm:$0x1] %vm305, %v304
        %v307 = vld [vmem:[#allocation3] sm:$0x1]
        %v309 = vcombine.high %v227, %v227
        %v311 = vsel %vm233, %v227, 0.0
        %v312 = vsel %vm233, %v309, 0.0
        %v313 = vadd.f32 %v311, %v312
        %314 = vadd.xlane.f32.xlu0 %v313
        %v315 = vpop.xlane.xlu0 %314
        %v317 = vlaneseq
        %v318 = vshrl.u32 %v317, 7
        %v319 = vsub.s32 0, %v318
        %v320 = vrot.slane %v315, %v319
        %v321 = vlaneseq
        %v322 = vshrl.u32 %v321, 7
        %v323 = vsub.s32 1, %v322
        %v324 = vrot.slane %v315, %v323
        %v325 = vlaneseq
        %v326 = vshrl.u32 %v325, 7
        %v327 = vsub.s32 2, %v326
        %v328 = vrot.slane %v315, %v327
        %v329 = vlaneseq
        %v330 = vshrl.u32 %v329, 7
        %v331 = vsub.s32 3, %v330
        %v332 = vrot.slane %v315, %v331
        %v333 = vcombine.low %v320, %v324
        %v334 = vcombine.low %v328, %v332
        %v336 = vunpack.c.l.s4 1966171168
        %v337 = vunpack.c.0.s8 %v336
        %v338 = vlaneseq
        %v339 = vshrl.u32 %v338, 7
        %v340 = vsub.s32 %v337, %v339
        %v341 = vrot.slane %v333, %v340
        %v343 = vunpack.c.l.s4 1966171168
        %v344 = vunpack.c.0.s8 %v343
        %v345 = vlaneseq
        %v346 = vshrl.u32 %v345, 7
        %v347 = vsub.s32 %v344, %v346
        %v348 = vrot.slane %v334, %v347
        %v349 = vcombine.low %v341, %v348
        %v351 = vunpack.c.l.s4 1966171168
        %v352 = vunpack.c.0.s8 %v351
        %v353 = vlaneseq
        %v354 = vshrl.u32 %v353, 7
        %v355 = vsub.s32 %v352, %v354
        %v356 = vrot.slane %v349, %v355
        %357 = vset.pattern.permute.xlu0 0
        %358 = vperm.xlu0 %357, %v356
        %v359 = vpop.permute.xlu0 %358
        %v360 = vlaneseq
        %v361 = vshrl.u32 %v360, 7
        %v362 = vsub.s32 %v284, %v361
        %v363 = vrot.slane %v359, %v362
        %v365 = vunpack.c.l.s4 1966171168
        %v366 = vunpack.c.0.s8 %v365
        %v367 = vlaneseq
        %v368 = vshrl.u32 %v367, 7
        %v369 = vsub.s32 %v366, %v368
        %v370 = vrot.slane %v363, %v369
        %v372 = vunpack.c.l.s4 1966171168
        %v373 = vunpack.c.0.s8 %v372
        %v374 = vlaneseq
        %v375 = vshrl.u32 %v374, 7
        %v376 = vsub.s32 %v373, %v375
        %v377 = vrot.slane %v370, %v376
        %v379 = vadd.f32 %v307, %v377
        %380 = vst.msk [vmem:[#allocation3] sm:$0x1] %vm305, %v379
        %v381 = vld [vmem:[#allocation4] sm:$0x1]
        %v382 = vmul.f32 %v228, %v227
        %v384 = vcombine.high %v382, %v382
        %v386 = vsel %vm233, %v382, 0.0
        %v387 = vsel %vm233, %v384, 0.0
        %v388 = vadd.f32 %v386, %v387
        %389 = vadd.xlane.f32.xlu0 %v388
        %v390 = vpop.xlane.xlu0 %389
        %v392 = vlaneseq
        %v393 = vshrl.u32 %v392, 7
        %v394 = vsub.s32 0, %v393
        %v395 = vrot.slane %v390, %v394
        %v396 = vlaneseq
        %v397 = vshrl.u32 %v396, 7
        %v398 = vsub.s32 1, %v397
        %v399 = vrot.slane %v390, %v398
        %v400 = vlaneseq
        %v401 = vshrl.u32 %v400, 7
        %v402 = vsub.s32 2, %v401
        %v403 = vrot.slane %v390, %v402
        %v404 = vlaneseq
        %v405 = vshrl.u32 %v404, 7
        %v406 = vsub.s32 3, %v405
        %v407 = vrot.slane %v390, %v406
        %v408 = vcombine.low %v395, %v399
        %v409 = vcombine.low %v403, %v407
        %v411 = vunpack.c.l.s4 1966171168
        %v412 = vunpack.c.0.s8 %v411
        %v413 = vlaneseq
        %v414 = vshrl.u32 %v413, 7
        %v415 = vsub.s32 %v412, %v414
        %v416 = vrot.slane %v408, %v415
        %v418 = vunpack.c.l.s4 1966171168
        %v419 = vunpack.c.0.s8 %v418
        %v420 = vlaneseq
        %v421 = vshrl.u32 %v420, 7
        %v422 = vsub.s32 %v419, %v421
        %v423 = vrot.slane %v409, %v422
        %v424 = vcombine.low %v416, %v423
        %v426 = vunpack.c.l.s4 1966171168
        %v427 = vunpack.c.0.s8 %v426
        %v428 = vlaneseq
        %v429 = vshrl.u32 %v428, 7
        %v430 = vsub.s32 %v427, %v429
        %v431 = vrot.slane %v424, %v430
        %432 = vset.pattern.permute.xlu0 0
        %433 = vperm.xlu0 %432, %v431
        %v434 = vpop.permute.xlu0 %433
        %v435 = vlaneseq
        %v436 = vshrl.u32 %v435, 7
        %v437 = vsub.s32 %v284, %v436
        %v438 = vrot.slane %v434, %v437
        %v440 = vunpack.c.l.s4 1966171168
        %v441 = vunpack.c.0.s8 %v440
        %v442 = vlaneseq
        %v443 = vshrl.u32 %v442, 7
        %v444 = vsub.s32 %v441, %v443
        %v445 = vrot.slane %v438, %v444
        %v447 = vunpack.c.l.s4 1966171168
        %v448 = vunpack.c.0.s8 %v447
        %v449 = vlaneseq
        %v450 = vshrl.u32 %v449, 7
        %v451 = vsub.s32 %v448, %v450
        %v452 = vrot.slane %v445, %v451
        %v454 = vadd.f32 %v381, %v452
        %455 = vst.msk [vmem:[#allocation4] sm:$0x1] %vm305, %v454
        %v456 = vld [vmem:[#allocation5] sm:$0x1]
        %v457 = vsel %vm233, %v228, -inf
        %v458 = vsel %vm233, %v231, -inf
        %v459 = vmax.f32 %v457, %v458
        %460 = vmax.xlane.f32.xlu0 %v459
        %v461 = vpop.xlane.xlu0 %460
        %v463 = vlaneseq
        %v464 = vshrl.u32 %v463, 7
        %v465 = vsub.s32 0, %v464
        %v466 = vrot.slane %v461, %v465
        %v467 = vlaneseq
        %v468 = vshrl.u32 %v467, 7
        %v469 = vsub.s32 1, %v468
        %v470 = vrot.slane %v461, %v469
        %v471 = vlaneseq
        %v472 = vshrl.u32 %v471, 7
        %v473 = vsub.s32 2, %v472
        %v474 = vrot.slane %v461, %v473
        %v475 = vlaneseq
        %v476 = vshrl.u32 %v475, 7
        %v477 = vsub.s32 3, %v476
        %v478 = vrot.slane %v461, %v477
        %v479 = vcombine.low %v466, %v470
        %v480 = vcombine.low %v474, %v478
        %v482 = vunpack.c.l.s4 1966171168
        %v483 = vunpack.c.0.s8 %v482
        %v484 = vlaneseq
        %v485 = vshrl.u32 %v484, 7
        %v486 = vsub.s32 %v483, %v485
        %v487 = vrot.slane %v479, %v486
        %v489 = vunpack.c.l.s4 1966171168
        %v490 = vunpack.c.0.s8 %v489
        %v491 = vlaneseq
        %v492 = vshrl.u32 %v491, 7
        %v493 = vsub.s32 %v490, %v492
        %v494 = vrot.slane %v480, %v493
        %v495 = vcombine.low %v487, %v494
        %v497 = vunpack.c.l.s4 1966171168
        %v498 = vunpack.c.0.s8 %v497
        %v499 = vlaneseq
        %v500 = vshrl.u32 %v499, 7
        %v501 = vsub.s32 %v498, %v500
        %v502 = vrot.slane %v495, %v501
        %503 = vset.pattern.permute.xlu0 0
        %504 = vperm.xlu0 %503, %v502
        %v505 = vpop.permute.xlu0 %504
        %v506 = vlaneseq
        %v507 = vshrl.u32 %v506, 7
        %v508 = vsub.s32 %v284, %v507
        %v509 = vrot.slane %v505, %v508
        %v511 = vunpack.c.l.s4 1966171168
        %v512 = vunpack.c.0.s8 %v511
        %v513 = vlaneseq
        %v514 = vshrl.u32 %v513, 7
        %v515 = vsub.s32 %v512, %v514
        %v516 = vrot.slane %v509, %v515
        %v518 = vunpack.c.l.s4 1966171168
        %v519 = vunpack.c.0.s8 %v518
        %v520 = vlaneseq
        %v521 = vshrl.u32 %v520, 7
        %v522 = vsub.s32 %v519, %v521
        %v523 = vrot.slane %v516, %v522
        %v525 = vmax.f32 %v456, %v523
        %526 = vst.msk [vmem:[#allocation5] sm:$0x1] %vm305, %v525
        // Predicated region
        $region41: #{tpu_custom_call.1} parent=27 // pred_check
          %p527 = pneg %p218
        $region42: #{tpu_custom_call.1} parent=27 // pred_check_branch
          %529 = sbr.rel (%p527) target = $region44
        $region43: #{tpu_custom_call.1} parent=27 // pred_region
          %v530 = vld [vmem:[#allocation2] sm:$0x1]
          %v531 = vld [vmem:[#allocation3] sm:$0x1]
          %v532 = vld [vmem:[#allocation4] sm:$0x1]
          %v533 = vld [vmem:[#allocation5] sm:$0x1]
          %v534 = vmul.f32 %v532, 2.0
          %v535 = vadd.f32 %v530, %v531
          %v536 = vrcp.pop %v535
          %v537 = vmul.f32 %v534, %v536
          %v538 = vsub.f32 1.0, %v537
          %vm539 = vcmp.eq.f32.partialorder %v533, 1.0
          %v540 = vsel %vm539, %v538, 0.0
          %v541 = vsel %vm305, %v540, 0.0
          %542 = vadd.xlane.f32.xlu0 %v541
          %v543 = vpop.xlane.xlu0 %542
          %vm544 = vcmp.ne.f32.partialorder %v540, 0.0
          %v545 = vsel %vm544, 1, 0
          %v546 = vcvt.s32.f32 %v545
          %v547 = vsel %vm305, %v546, 0.0
          %548 = vadd.xlane.f32.xlu0 %v547
          %v549 = vpop.xlane.xlu0 %548
          %v550 = vrcp.pop %v549
          %v551 = vmul.f32 %v543, %v550
          %vm552 = vcmask 0
          %553 = vst.msk [vmem:[%s217] sm:$0x1] %vm552, %v551
        $region44: #{tpu_custom_call.1} parent=27 // pred_fallthru
          _
        %p554 = scmp.lt.s32.totalorder %s23, 1
        %s555 = scalar_select %p554, %s23, 1
        %s556 = scalar_lea.vmem %s2, %s555
        // Predicated region
        $region45: #{tpu_custom_call.1} parent=27 // pred_check
          %p557 = pneg %p105
        $region46: #{tpu_custom_call.1} parent=27 // pred_check_branch
          %559 = sbr.rel (%p557) target = $region48
        $region47: #{tpu_custom_call.1} parent=27 // pred_region
          _
        $region48: #{tpu_custom_call.1} parent=27 // pred_fallthru
          _
      $region28: #{tpu_custom_call.1} parent=5 // pred_fallthru
        _
      %p560 = scmp.le.s32.totalorder 2, %s14
      // Predicated region
      $region49: #{tpu_custom_call.1} parent=5 // pred_check
        %p561 = pneg %p560
      $region50: #{tpu_custom_call.1} parent=5 // pred_check_branch
        %563 = sbr.rel (%p561) target = $region52
      $region51: #{tpu_custom_call.1} parent=5 // pred_region
        %s564 = ssub.s32 %s14, 2
        // Predicated region
        $region53: #{tpu_custom_call.1} parent=51 // pred_check
          %p565 = pneg %p111
        $region54: #{tpu_custom_call.1} parent=51 // pred_check_branch
          %567 = sbr.rel (%p565) target = $region56
        $region55: #{tpu_custom_call.1} parent=51 // pred_region
          %p568 = scmp.lt.s32.totalorder %s25, 1
          %s569 = scalar_select %p568, %s25, 1
          %s570 = scalar_lea.vmem %s2, %s569
        $region56: #{tpu_custom_call.1} parent=51 // pred_fallthru
          _
      $region52: #{tpu_custom_call.1} parent=5 // pred_fallthru
        _
    $region6: #{tpu_custom_call.1} parent=1 // loop_footer
      %s18 = sadd.s32 1, %s14
    $region7: #{tpu_custom_call.1} parent=1 // loop_footer_branch
      %13 = sbr.rel target = $region3
    $region8: #{tpu_custom_call.1} parent=1 // loop_exit
      _
    %571 = vsyncpa [#allocation7], 1
    %s572 = scalar_lea.sflag [#allocation7], 1
    %573 = vsyncpa %s572, 1
    %574 = vsyncpa [#allocation9], 1
    %s575 = scalar_lea.sflag [#allocation9], 1
    %576 = vsyncpa %s575, 1

</llo_original>
